<compile_context>
chip_gen: v6e
topology: v6e:2x2x1
jax: 0.10.0
libtpu: 0.0.40
codegen_flags: <defaults>
</compile_context>

<pallas_src>
import functools

import numpy as np
import jax
import jax.numpy as jnp
from jax.experimental import pallas as pl
from jax.experimental.pallas import tpu as pltpu

_LANE = 128      # hidden dims padded to a multiple of the lane width
_SUBLANE = 8     # batch tiles padded to a multiple of the sublane width


def _round_up(x: int, m: int) -> int:
    return ((x + m - 1) // m) * m


def _pad2(a, rows: int, cols: int):
    r, c = a.shape
    if rows == r and cols == c:
        return a
    return jnp.pad(a, ((0, rows - r), (0, cols - c)))


def _mlp_kernel(obs_ref, w1_ref, b1_ref, w2_ref, b2_ref, w3_ref, b3_ref, out_ref):
    """Fused 3-layer MLP on one batch tile.

    obs arrives pre-cast to bf16; dots run on the MXU in bf16 with f32
    accumulation; bias add + ReLU (epilogue) stay in f32 on the VPU.
    Weights/biases are VMEM-resident across grid steps (constant index_map).
    """
    x = obs_ref[...]                                   # bf16 already (wrapper cast)
    h1 = jnp.dot(x, w1_ref[...], preferred_element_type=jnp.float32) + b1_ref[...]
    h1 = jnp.maximum(h1, 0.0).astype(jnp.bfloat16)
    h2 = jnp.dot(h1, w2_ref[...], preferred_element_type=jnp.float32) + b2_ref[...]
    h2 = jnp.maximum(h2, 0.0).astype(jnp.bfloat16)
    out_ref[...] = (
        jnp.dot(h2, w3_ref[...], preferred_element_type=jnp.float32) + b3_ref[...]
    )


@functools.partial(jax.jit, static_argnames=("batch_tile",))
def mlp_forward(obs, params, *, batch_tile: int = 4096):
    """Run the fused MLP Pallas kernel.

    obs: (B, obs_dim) float32.  Weights are (in, out), biases (1, out), f32;
    hidden-dim padding to 128-lane multiples and the bf16 cast happen here
    (fused with the pallas_call under jit).
    """
    w1, b1, w2, b2, w3, b3 = params
    obs = jnp.asarray(obs, jnp.float32)
    B, Din = obs.shape
    H1, H2, Dout = w1.shape[1], w2.shape[1], w3.shape[1]

    # Hidden dims lane-padded (cheap, keeps intermediates lane-dense).  Din and
    # Dout are left unpadded: their blocks span the full array dim, which the
    # tiling rule allows, and it avoids streaming padded zero bytes over HBM.
    H1_p = _round_up(H1, _LANE)
    H2_p = _round_up(H2, _LANE)

    # Batch tiling: largest tile that amortizes per-step overhead while still
    # giving >= 2 grid steps when the batch is big enough (so both TensorCores
    # on v7x get work under dimension_semantics=("parallel",)).
    b_pad = _round_up(B, _SUBLANE)
    tb = min(batch_tile, b_pad)
    if b_pad // tb < 2 and b_pad >= 2 * _SUBLANE:
        tb = _round_up(pl.cdiv(b_pad, 2), _SUBLANE)
    B_p = _round_up(B, tb)

    # Pad batch rows only if needed, then cast the streaming input to bf16
    # (halves the dominant HBM->VMEM DMA).  Zero padding is mathematically inert.
    if B_p != B:
        obs = jnp.pad(obs, ((0, B_p - B), (0, 0)))
    obs_p = obs.astype(jnp.bfloat16)

    w1_p = _pad2(w1, Din, H1_p).astype(jnp.bfloat16)
    w2_p = _pad2(w2, H1_p, H2_p).astype(jnp.bfloat16)
    w3_p = _pad2(w3, H2_p, Dout).astype(jnp.bfloat16)
    b1_p = _pad2(b1, 1, H1_p)      # f32 epilogue
    b2_p = _pad2(b2, 1, H2_p)
    b3_p = b3                      # (1, Dout), unpadded

    grid = (B_p // tb,)

    flops = 2 * B_p * (Din * H1_p + H1_p * H2_p + H2_p * Dout)
    bytes_accessed = (
        B_p * Din * 2                                   # obs (bf16)
        + (Din * H1_p + H1_p * H2_p + H2_p * Dout) * 2  # weights (bf16)
        + (H1_p + H2_p + Dout) * 4                      # biases (f32)
        + B_p * Dout * 4                                # logits (f32)
    )

    out_p = pl.pallas_call(
        _mlp_kernel,
        out_shape=jax.ShapeDtypeStruct((B_p, Dout), jnp.float32),
        grid_spec=pltpu.PrefetchScalarGridSpec(
            num_scalar_prefetch=0,
            grid=grid,
            in_specs=[
                pl.BlockSpec((tb, Din), lambda i: (i, 0)),        # obs tile (bf16)
                pl.BlockSpec((Din, H1_p), lambda i: (0, 0)),      # W1 (resident)
                pl.BlockSpec((1, H1_p), lambda i: (0, 0)),        # b1 (resident)
                pl.BlockSpec((H1_p, H2_p), lambda i: (0, 0)),     # W2 (resident)
                pl.BlockSpec((1, H2_p), lambda i: (0, 0)),        # b2 (resident)
                pl.BlockSpec((H2_p, Dout), lambda i: (0, 0)),     # W3 (resident)
                pl.BlockSpec((1, Dout), lambda i: (0, 0)),        # b3 (resident)
            ],
            out_specs=pl.BlockSpec((tb, Dout), lambda i: (i, 0)), # full-width out
        ),
        compiler_params=pltpu.CompilerParams(
            dimension_semantics=("parallel",),   # shards batch tiles across TCs
        ),
        cost_estimate=pl.CostEstimate(
            flops=flops, transcendentals=0, bytes_accessed=bytes_accessed),
    )(obs_p, w1_p, b1_p, w2_p, b2_p, w3_p, b3_p)

    # Strip batch padding (no feature padding to strip); fused under jit.
    if B_p != B:
        out_p = out_p[:B]
    return out_p


def init_params(key, obs_dim, hidden_dim, action_dim):
    """Deterministic parameter init (weights as (in, out), biases as (1, out), f32)."""
    k1, k2, k3 = jax.random.split(key, 3)

    def linear(k, fan_in, fan_out):
        bound = 1.0 / np.sqrt(fan_in)
        kw, kb = jax.random.split(k)
        w = jax.random.uniform(kw, (fan_in, fan_out), jnp.float32, -bound, bound)
        b = jax.random.uniform(kb, (1, fan_out), jnp.float32, -bound, bound)
        return w, b

    w1, b1 = linear(k1, obs_dim, hidden_dim)
    w2, b2 = linear(k2, hidden_dim, hidden_dim)
    w3, b3 = linear(k3, hidden_dim, action_dim)
    return (w1, b1, w2, b2, w3, b3)


def data_parallel_net_forward(obs, params, *, batch_tile: int = 4096):
    """DataParallelNet.forward semantics:
    - cast obs (numpy or array) to float32
    - invoke the wrapped net, returning (logits, state)
    # TODO(synk): nn.DataParallel GPU sharding / .cuda() is device plumbing with no
    # math effect on TPU; multi-device sharding would live outside the kernel.
    # NOTE: the kernel uses bf16 MXU dots (f32 accumulate), a small numeric
    # deviation from the PyTorch f32 path (acceptable per review).
    """
    obs = jnp.asarray(obs, dtype=jnp.float32)
    logits = mlp_forward(obs, params, batch_tile=batch_tile)
    state = None  # tianshou Net returns (logits, state); state is passed through
    return logits, state


def _reference(obs, params, use_bf16_dots):
    """Plain-JAX reference; optionally mirrors the kernel's bf16-MXU numerics."""
    w1, b1, w2, b2, w3, b3 = params
    x = jnp.asarray(obs, jnp.float32)

    def dot(a, w):
        if use_bf16_dots:
            return jnp.dot(a.astype(jnp.bfloat16), w.astype(jnp.bfloat16),
                           preferred_element_type=jnp.float32)
        return jnp.dot(a, w, preferred_element_type=jnp.float32)

    h = jnp.maximum(dot(x, w1) + b1, 0.0)
    h = jnp.maximum(dot(h, w2) + b2, 0.0)
    return dot(h, w3) + b3


if __name__ == "__main__":
    key = jax.random.PRNGKey(0)
    batch, obs_dim, hidden_dim, action_dim = 8, 32, 64, 16

    k_obs, k_par, k_obs2 = jax.random.split(key, 3)
    # Feed a numpy array to exercise the "convert input to float32 tensor" path.
    obs_np = np.asarray(jax.random.normal(k_obs, (batch, obs_dim), jnp.float32))
    params = init_params(k_par, obs_dim, hidden_dim, action_dim)

    logits, state = data_parallel_net_forward(obs_np, params)
    logits = jax.block_until_ready(logits)

    assert logits.shape == (batch, action_dim)
    assert state is None

    # Check against a reference that mirrors the kernel's bf16-dot / f32-accumulate
    # numerics, plus a loose check against pure f32.
    ref_bf16 = _reference(obs_np, params, use_bf16_dots=True)
    ref_f32 = _reference(obs_np, params, use_bf16_dots=False)
    np.testing.assert_allclose(np.asarray(logits), np.asarray(ref_bf16),
                               rtol=2e-3, atol=2e-3)
    np.testing.assert_allclose(np.asarray(logits), np.asarray(ref_f32),
                               rtol=3e-2, atol=3e-2)

    # Exercise the multi-step grid + ragged-batch padding path with a tiny tile.
    batch2 = 20
    obs2 = np.asarray(jax.random.normal(k_obs2, (batch2, obs_dim), jnp.float32))
    logits2, _ = data_parallel_net_forward(obs2, params, batch_tile=8)
    logits2 = jax.block_until_ready(logits2)
    assert logits2.shape == (batch2, action_dim)
    np.testing.assert_allclose(
        np.asarray(logits2),
        np.asarray(_reference(obs2, params, use_bf16_dots=True)),
        rtol=2e-3, atol=2e-3)

    print("KERNEL_OK")
</pallas_src>

<mosaic_0001>
module attributes {stable_mosaic.version = 11 : i64} {
  func.func @_mlp_kernel(%arg0: i32, %arg1: memref<8x32xbf16, #tpu.memory_space<vmem>>, %arg2: memref<32x128xbf16, #tpu.memory_space<vmem>>, %arg3: memref<1x128xf32, #tpu.memory_space<vmem>>, %arg4: memref<128x128xbf16, #tpu.memory_space<vmem>>, %arg5: memref<1x128xf32, #tpu.memory_space<vmem>>, %arg6: memref<128x16xbf16, #tpu.memory_space<vmem>>, %arg7: memref<1x16xf32, #tpu.memory_space<vmem>>, %arg8: memref<8x16xf32, #tpu.memory_space<vmem>>) attributes {dimension_semantics = [#tpu.dimension_semantics<parallel>], iteration_bounds = array<i64: 1>, scalar_prefetch = 0 : i64, scratch_operands = 0 : i64, tpu.core_type = #tpu.core_type<tc>, window_params = [{transform_indices = @transform_0, window_bounds = array<i64: 8, 32>}, {pipeline_mode = #tpu.pipeline_mode<synchronous>, transform_indices = @transform_1, window_bounds = array<i64: 32, 128>}, {pipeline_mode = #tpu.pipeline_mode<synchronous>, transform_indices = @transform_2, window_bounds = array<i64: 1, 128>}, {pipeline_mode = #tpu.pipeline_mode<synchronous>, transform_indices = @transform_3, window_bounds = array<i64: 128, 128>}, {pipeline_mode = #tpu.pipeline_mode<synchronous>, transform_indices = @transform_4, window_bounds = array<i64: 1, 128>}, {pipeline_mode = #tpu.pipeline_mode<synchronous>, transform_indices = @transform_5, window_bounds = array<i64: 128, 16>}, {pipeline_mode = #tpu.pipeline_mode<synchronous>, transform_indices = @transform_6, window_bounds = array<i64: 1, 16>}, {transform_indices = @transform_7, window_bounds = array<i64: 8, 16>}]} {
    %c0 = arith.constant 0 : index
    %c0_0 = arith.constant 0 : index
    %0 = vector.load %arg1[%c0, %c0_0] : memref<8x32xbf16, #tpu.memory_space<vmem>>, vector<8x32xbf16>
    %c0_1 = arith.constant 0 : index
    %c0_2 = arith.constant 0 : index
    %1 = vector.load %arg2[%c0_1, %c0_2] : memref<32x128xbf16, #tpu.memory_space<vmem>>, vector<32x128xbf16>
    %cst = arith.constant dense<0.000000e+00> : vector<8x128xf32>
    %2 = tpu.matmul %0, %1, %cst {dimension_numbers = #tpu.dot_dimension_numbers<[1], [0], [0], [1], [0, 0, 1, 1], [], []>} : vector<8x32xbf16>, vector<32x128xbf16>, vector<8x128xf32> -> vector<8x128xf32>
    %c0_3 = arith.constant 0 : index
    %c0_4 = arith.constant 0 : index
    %3 = vector.load %arg3[%c0_3, %c0_4] : memref<1x128xf32, #tpu.memory_space<vmem>>, vector<1x128xf32>
    %4 = vector.broadcast %3 : vector<1x128xf32> to vector<8x128xf32>
    %5 = arith.addf %2, %4 : vector<8x128xf32>
    %cst_5 = arith.constant 0.000000e+00 : f32
    %6 = vector.broadcast %cst_5 : f32 to vector<8x128xf32>
    %7 = arith.maximumf %5, %6 : vector<8x128xf32>
    %8 = arith.truncf %7 : vector<8x128xf32> to vector<8x128xbf16>
    %c0_6 = arith.constant 0 : index
    %c0_7 = arith.constant 0 : index
    %9 = vector.load %arg4[%c0_6, %c0_7] : memref<128x128xbf16, #tpu.memory_space<vmem>>, vector<128x128xbf16>
    %cst_8 = arith.constant dense<0.000000e+00> : vector<8x128xf32>
    %10 = tpu.matmul %8, %9, %cst_8 {dimension_numbers = #tpu.dot_dimension_numbers<[1], [0], [0], [1], [0, 0, 1, 1], [], []>} : vector<8x128xbf16>, vector<128x128xbf16>, vector<8x128xf32> -> vector<8x128xf32>
    %c0_9 = arith.constant 0 : index
    %c0_10 = arith.constant 0 : index
    %11 = vector.load %arg5[%c0_9, %c0_10] : memref<1x128xf32, #tpu.memory_space<vmem>>, vector<1x128xf32>
    %12 = vector.broadcast %11 : vector<1x128xf32> to vector<8x128xf32>
    %13 = arith.addf %10, %12 : vector<8x128xf32>
    %cst_11 = arith.constant 0.000000e+00 : f32
    %14 = vector.broadcast %cst_11 : f32 to vector<8x128xf32>
    %15 = arith.maximumf %13, %14 : vector<8x128xf32>
    %16 = arith.truncf %15 : vector<8x128xf32> to vector<8x128xbf16>
    %c0_12 = arith.constant 0 : index
    %c0_13 = arith.constant 0 : index
    %17 = vector.load %arg6[%c0_12, %c0_13] : memref<128x16xbf16, #tpu.memory_space<vmem>>, vector<128x16xbf16>
    %cst_14 = arith.constant dense<0.000000e+00> : vector<8x16xf32>
    %18 = tpu.matmul %16, %17, %cst_14 {dimension_numbers = #tpu.dot_dimension_numbers<[1], [0], [0], [1], [0, 0, 1, 1], [], []>} : vector<8x128xbf16>, vector<128x16xbf16>, vector<8x16xf32> -> vector<8x16xf32>
    %c0_15 = arith.constant 0 : index
    %c0_16 = arith.constant 0 : index
    %19 = vector.load %arg7[%c0_15, %c0_16] : memref<1x16xf32, #tpu.memory_space<vmem>>, vector<1x16xf32>
    %20 = vector.broadcast %19 : vector<1x16xf32> to vector<8x16xf32>
    %21 = arith.addf %18, %20 : vector<8x16xf32>
    %c0_17 = arith.constant 0 : index
    %c0_18 = arith.constant 0 : index
    %22 = vector.load %arg8[%c0_17, %c0_18] : memref<8x16xf32, #tpu.memory_space<vmem>>, vector<8x16xf32>
    tpu.vector_store %arg8[%c0_17, %c0_18], %21 {strides = array<i32>} : memref<8x16xf32, #tpu.memory_space<vmem>>, vector<8x16xf32>,
    return
  }
  func.func @transform_0(%arg0: i32) -> (i32, i32) {
    %c0_i32 = arith.constant 0 : i32
    %c0_i32_0 = arith.constant 0 : i32
    return %arg0, %c0_i32 : i32, i32
  }
  func.func @transform_1(%arg0: i32) -> (i32, i32) {
    %c0_i32 = arith.constant 0 : i32
    %c0_i32_0 = arith.constant 0 : i32
    %c0_i32_1 = arith.constant 0 : i32
    return %c0_i32, %c0_i32_0 : i32, i32
  }
  func.func @transform_2(%arg0: i32) -> (i32, i32) {
    %c0_i32 = arith.constant 0 : i32
    %c0_i32_0 = arith.constant 0 : i32
    %c0_i32_1 = arith.constant 0 : i32
    return %c0_i32, %c0_i32_0 : i32, i32
  }
  func.func @transform_3(%arg0: i32) -> (i32, i32) {
    %c0_i32 = arith.constant 0 : i32
    %c0_i32_0 = arith.constant 0 : i32
    %c0_i32_1 = arith.constant 0 : i32
    return %c0_i32, %c0_i32_0 : i32, i32
  }
  func.func @transform_4(%arg0: i32) -> (i32, i32) {
    %c0_i32 = arith.constant 0 : i32
    %c0_i32_0 = arith.constant 0 : i32
    %c0_i32_1 = arith.constant 0 : i32
    return %c0_i32, %c0_i32_0 : i32, i32
  }
  func.func @transform_5(%arg0: i32) -> (i32, i32) {
    %c0_i32 = arith.constant 0 : i32
    %c0_i32_0 = arith.constant 0 : i32
    %c0_i32_1 = arith.constant 0 : i32
    return %c0_i32, %c0_i32_0 : i32, i32
  }
  func.func @transform_6(%arg0: i32) -> (i32, i32) {
    %c0_i32 = arith.constant 0 : i32
    %c0_i32_0 = arith.constant 0 : i32
    %c0_i32_1 = arith.constant 0 : i32
    return %c0_i32, %c0_i32_0 : i32, i32
  }
  func.func @transform_7(%arg0: i32) -> (i32, i32) {
    %c0_i32 = arith.constant 0 : i32
    %c0_i32_0 = arith.constant 0 : i32
    return %arg0, %c0_i32 : i32, i32
  }
}

</mosaic_0001>

<llo_original>
// kernel: mlp_forward.1
$region0: #{mlp_forward.1}
  #allocation0 [shape = 'u32[]', space=smem, size = 0x4, offset = 0x4, fixed_abs, tag = 'smem constant byte address 0x4 - core index']
  #allocation1 [shape = 'u32[144,128]{1,0:T(1,128)}', space=vmem, size = 0x12000, scoped, tag = 'internal scratch']
  %s0 = inlined_call_operand.vmem [shape: bf16[8,32], index: 0, kind: input, shape index: {}]
  %s1 = inlined_call_operand.vmem [shape: bf16[32,128], index: 1, kind: input, shape index: {}]
  %s2 = inlined_call_operand.vmem [shape: f32[1,128], index: 2, kind: input, shape index: {}]
  %s3 = inlined_call_operand.vmem [shape: bf16[128,128], index: 3, kind: input, shape index: {}]
  %s4 = inlined_call_operand.vmem [shape: f32[1,128], index: 4, kind: input, shape index: {}]
  %s5 = inlined_call_operand.vmem [shape: bf16[128,16], index: 5, kind: input, shape index: {}]
  %s6 = inlined_call_operand.vmem [shape: f32[1,16], index: 6, kind: input, shape index: {}]
  %s7 = inlined_call_operand.hbm [shape: f32[8,16], index: 7, kind: output, shape index: {}]
  %s8 = sld [smem:[#allocation0]]
  $region38: #{mlp_forward.1} parent=0
    _
  %s10 = ssub.s32 1, %s8
  %s11 = scalar_select 0, %s10, %s8
  $region1: #{mlp_forward.1} parent=0
    #allocation2 [shape = 'u8[4096]{0}', space=vmem, size = 0x1000, scoped, tag = 'output window, operand 0, single buffered']
    #allocation3 [shape = 's32[1]{0}', space=sflag, size = 0x4, scoped, tag = 'scoped memory for mlp_forward.1']
    %12 = vsyncpa [#allocation3], 0
    // Predicated region
    $region2: #{mlp_forward.1} parent=1 // pred_check
      _
    $region3: #{mlp_forward.1} parent=1 // pred_check_branch
      %14 = sbr.rel (0) target = $region5
    $region4: #{mlp_forward.1} parent=1 // pred_region
      _
    $region5: #{mlp_forward.1} parent=1 // pred_fallthru
      _
    // Predicated region
    $region6: #{mlp_forward.1} parent=1 // pred_check
      _
    $region7: #{mlp_forward.1} parent=1 // pred_check_branch
      %16 = sbr.rel (0) target = $region9
    $region8: #{mlp_forward.1} parent=1 // pred_region
      _
    $region9: #{mlp_forward.1} parent=1 // pred_fallthru
      _
    // Predicated region
    $region10: #{mlp_forward.1} parent=1 // pred_check
      _
    $region11: #{mlp_forward.1} parent=1 // pred_check_branch
      %18 = sbr.rel (0) target = $region13
    $region12: #{mlp_forward.1} parent=1 // pred_region
      _
    $region13: #{mlp_forward.1} parent=1 // pred_fallthru
      _
    // Predicated region
    $region14: #{mlp_forward.1} parent=1 // pred_check
      _
    $region15: #{mlp_forward.1} parent=1 // pred_check_branch
      %20 = sbr.rel (0) target = $region17
    $region16: #{mlp_forward.1} parent=1 // pred_region
      _
    $region17: #{mlp_forward.1} parent=1 // pred_fallthru
      _
    // Predicated region
    $region18: #{mlp_forward.1} parent=1 // pred_check
      _
    $region19: #{mlp_forward.1} parent=1 // pred_check_branch
      %22 = sbr.rel (0) target = $region21
    $region20: #{mlp_forward.1} parent=1 // pred_region
      _
    $region21: #{mlp_forward.1} parent=1 // pred_fallthru
      _
    // Predicated region
    $region22: #{mlp_forward.1} parent=1 // pred_check
      _
    $region23: #{mlp_forward.1} parent=1 // pred_check_branch
      %24 = sbr.rel (0) target = $region25
    $region24: #{mlp_forward.1} parent=1 // pred_region
      _
    $region25: #{mlp_forward.1} parent=1 // pred_fallthru
      _
    // Predicated region
    $region26: #{mlp_forward.1} parent=1 // pred_check
      _
    $region27: #{mlp_forward.1} parent=1 // pred_check_branch
      %26 = sbr.rel (0) target = $region29
    $region28: #{mlp_forward.1} parent=1 // pred_region
      _
    $region29: #{mlp_forward.1} parent=1 // pred_fallthru
      _
    %v28 = vld [vmem:[%s0] sm:$0xf]
    %v29 = vld [vmem:[%s1] sm:$0xf]
    %v30 = vld [vmem:[%s1 + $0x4] sm:$0xf]
    %v31 = vld [vmem:[%s1 + $0x8] sm:$0xf]
    %v32 = vld [vmem:[%s1 + $0xc] sm:$0xf]
    %v33 = vld [vmem:[%s2] sm:$0x1]
    %v35 = vlaneseq
    %v36 = vshrl.u32 %v35, 7
    %v37 = vsub.s32 0, %v36
    %v38 = vrot.slane %v33, %v37
    %v44 = vunpack.c.l.b16 %v29
    %v45 = vunpack.c.l.b16 %v30
    %v46 = vunpack.c.l.b16 %v31
    %v47 = vunpack.c.l.b16 %v32
    %v48 = vpack.c.b16 %v45, %v44
    %v49 = vpack.c.b16 %v47, %v46
    %vm52 = vcmask 261120
    %v54 = vsel %vm52, %v28, 0
    %56 = vmatprep.subr.bf16.mxu0 0
    %57 = vmatpush1.bf16.msra.mxu0 0
    %58 = vmatprep.subr.bf16.mxu0 0
    %59 = vmatpush1.bf16.msra.mxu0 0
    %60 = vmatprep.subr.bf16.mxu0 0
    %61 = vmatpush1.bf16.msra.mxu0 0
    %62 = vmatprep.subr.bf16.mxu0 0
    %63 = vmatpush1.bf16.msra.mxu0 0
    %64 = vmatprep.subr.bf16.mxu0 0
    %65 = vmatpush1.bf16.msra.mxu0 0
    %66 = vmatprep.subr.bf16.mxu0 0
    %67 = vmatpush1.bf16.msra.mxu0 0
    %68 = vmatprep.subr.bf16.mxu0 0
    %69 = vmatpush1.bf16.msra.mxu0 %v49
    %70 = vmatprep.subr.bf16.mxu0 0
    %71 = vmatpush1.bf16.msra.mxu0 %v48
    %72 = vmatprep.subr.bf16.mxu0 0
    %73 = vmatpush2.bf16.msra.mxu0 0
    %74 = vmatprep.subr.bf16.mxu0 0
    %75 = vmatpush2.bf16.msra.mxu0 0
    %76 = vmatprep.subr.bf16.mxu0 0
    %77 = vmatpush2.bf16.msra.mxu0 0
    %78 = vmatprep.subr.bf16.mxu0 0
    %79 = vmatpush2.bf16.msra.mxu0 0
    %80 = vmatprep.subr.bf16.mxu0 0
    %81 = vmatpush2.bf16.msra.mxu0 0
    %82 = vmatprep.subr.bf16.mxu0 0
    %83 = vmatpush2.bf16.msra.mxu0 0
    %84 = vmatprep.subr.bf16.mxu0 0
    %85 = vmatpush2.bf16.msra.mxu0 0
    %86 = vmatprep.subr.bf16.mxu0 0
    %87 = vmatpush2.bf16.msra.mxu0 0
    %88 = vmatprep.mubr.bf16.mxu0 0
    %89 = vmatmul.mubr.bf16.gmra.mxu0 %v54
    %v90 = vpop.f32.mrf.mxu0
    %v91 = vadd.f32 %v38, %v90
    %v92 = vpop.f32.mrf.mxu0
    %v93 = vpop.f32.mrf.mxu0
    %v94 = vpop.f32.mrf.mxu0
    %95 = vdwg.mxu0
    %v96 = vmax.f32 %v91, 0.0
    %v97 = vpack.c.bf16 %v96, %v96
    %v98 = vld [vmem:[%s3] sm:$0xf]
    %v99 = vld [vmem:[%s3 + $0x4] sm:$0xf]
    %v100 = vld [vmem:[%s3 + $0x8] sm:$0xf]
    %v101 = vld [vmem:[%s3 + $0xc] sm:$0xf]
    %v102 = vld [vmem:[%s3 + $0x10] sm:$0xf]
    %v103 = vld [vmem:[%s3 + $0x14] sm:$0xf]
    %v104 = vld [vmem:[%s3 + $0x18] sm:$0xf]
    %v105 = vld [vmem:[%s3 + $0x1c] sm:$0xf]
    %v106 = vld [vmem:[%s3 + $0x20] sm:$0xf]
    %v107 = vld [vmem:[%s3 + $0x24] sm:$0xf]
    %v108 = vld [vmem:[%s3 + $0x28] sm:$0xf]
    %v109 = vld [vmem:[%s3 + $0x2c] sm:$0xf]
    %v110 = vld [vmem:[%s3 + $0x30] sm:$0xf]
    %v111 = vld [vmem:[%s3 + $0x34] sm:$0xf]
    %v112 = vld [vmem:[%s3 + $0x38] sm:$0xf]
    %v113 = vld [vmem:[%s3 + $0x3c] sm:$0xf]
    %v114 = vld [vmem:[%s4] sm:$0x1]
    %v116 = vlaneseq
    %v117 = vshrl.u32 %v116, 7
    %v118 = vsub.s32 0, %v117
    %v119 = vrot.slane %v114, %v118
    %v137 = vunpack.c.l.b16 %v98
    %v138 = vunpack.c.l.b16 %v99
    %v139 = vunpack.c.l.b16 %v100
    %v140 = vunpack.c.l.b16 %v101
    %v141 = vunpack.c.l.b16 %v102
    %v142 = vunpack.c.l.b16 %v103
    %v143 = vunpack.c.l.b16 %v104
    %v144 = vunpack.c.l.b16 %v105
    %v145 = vunpack.c.l.b16 %v106
    %v146 = vunpack.c.l.b16 %v107
    %v147 = vunpack.c.l.b16 %v108
    %v148 = vunpack.c.l.b16 %v109
    %v149 = vunpack.c.l.b16 %v110
    %v150 = vunpack.c.l.b16 %v111
    %v151 = vunpack.c.l.b16 %v112
    %v152 = vunpack.c.l.b16 %v113
    %v153 = vpack.c.b16 %v138, %v137
    %v154 = vpack.c.b16 %v140, %v139
    %v155 = vpack.c.b16 %v142, %v141
    %v156 = vpack.c.b16 %v144, %v143
    %v157 = vpack.c.b16 %v146, %v145
    %v158 = vpack.c.b16 %v148, %v147
    %v159 = vpack.c.b16 %v150, %v149
    %v160 = vpack.c.b16 %v152, %v151
    %169 = vmatprep.subr.bf16.mxu0 0
    %170 = vmatpush1.bf16.msra.mxu0 %v160
    %171 = vmatprep.subr.bf16.mxu0 0
    %172 = vmatpush1.bf16.msra.mxu0 %v159
    %173 = vmatprep.subr.bf16.mxu0 0
    %174 = vmatpush1.bf16.msra.mxu0 %v158
    %175 = vmatprep.subr.bf16.mxu0 0
    %176 = vmatpush1.bf16.msra.mxu0 %v157
    %177 = vmatprep.subr.bf16.mxu0 0
    %178 = vmatpush1.bf16.msra.mxu0 %v156
    %179 = vmatprep.subr.bf16.mxu0 0
    %180 = vmatpush1.bf16.msra.mxu0 %v155
    %181 = vmatprep.subr.bf16.mxu0 0
    %182 = vmatpush1.bf16.msra.mxu0 %v154
    %183 = vmatprep.subr.bf16.mxu0 0
    %184 = vmatpush1.bf16.msra.mxu0 %v153
    %185 = vmatprep.subr.bf16.mxu0 0
    %186 = vmatpush2.bf16.msra.mxu0 0
    %187 = vmatprep.subr.bf16.mxu0 0
    %188 = vmatpush2.bf16.msra.mxu0 0
    %189 = vmatprep.subr.bf16.mxu0 0
    %190 = vmatpush2.bf16.msra.mxu0 0
    %191 = vmatprep.subr.bf16.mxu0 0
    %192 = vmatpush2.bf16.msra.mxu0 0
    %193 = vmatprep.subr.bf16.mxu0 0
    %194 = vmatpush2.bf16.msra.mxu0 0
    %195 = vmatprep.subr.bf16.mxu0 0
    %196 = vmatpush2.bf16.msra.mxu0 0
    %197 = vmatprep.subr.bf16.mxu0 0
    %198 = vmatpush2.bf16.msra.mxu0 0
    %199 = vmatprep.subr.bf16.mxu0 0
    %200 = vmatpush2.bf16.msra.mxu0 0
    %201 = vmatprep.mubr.bf16.mxu0 0
    %202 = vmatmul.mubr.bf16.gmra.mxu0 %v97
    %v203 = vpop.f32.mrf.mxu0
    %v204 = vadd.f32 %v119, %v203
    %v205 = vpop.f32.mrf.mxu0
    %v206 = vpop.f32.mrf.mxu0
    %v207 = vpop.f32.mrf.mxu0
    %208 = vdwg.mxu0
    %v209 = vmax.f32 %v204, 0.0
    %v210 = vpack.c.bf16 %v209, %v209
    %v211 = vld [vmem:[%s5] sm:$0xf]
    %v212 = vld [vmem:[%s5 + $0x4] sm:$0xf]
    %v213 = vld [vmem:[%s5 + $0x8] sm:$0xf]
    %v214 = vld [vmem:[%s5 + $0xc] sm:$0xf]
    %v215 = vld [vmem:[%s5 + $0x10] sm:$0xf]
    %v216 = vld [vmem:[%s5 + $0x14] sm:$0xf]
    %v217 = vld [vmem:[%s5 + $0x18] sm:$0xf]
    %v218 = vld [vmem:[%s5 + $0x1c] sm:$0xf]
    %v219 = vld [vmem:[%s5 + $0x20] sm:$0xf]
    %v220 = vld [vmem:[%s5 + $0x24] sm:$0xf]
    %v221 = vld [vmem:[%s5 + $0x28] sm:$0xf]
    %v222 = vld [vmem:[%s5 + $0x2c] sm:$0xf]
    %v223 = vld [vmem:[%s5 + $0x30] sm:$0xf]
    %v224 = vld [vmem:[%s5 + $0x34] sm:$0xf]
    %v225 = vld [vmem:[%s5 + $0x38] sm:$0xf]
    %v226 = vld [vmem:[%s5 + $0x3c] sm:$0xf]
    %v227 = vld [vmem:[%s6] sm:$0x1]
    %v229 = vlaneseq
    %v230 = vshrl.u32 %v229, 7
    %v231 = vsub.s32 0, %v230
    %v232 = vrot.slane %v227, %v231
    %v250 = vunpack.c.l.b16 %v211
    %v251 = vunpack.c.l.b16 %v212
    %v252 = vunpack.c.l.b16 %v213
    %v253 = vunpack.c.l.b16 %v214
    %v254 = vunpack.c.l.b16 %v215
    %v255 = vunpack.c.l.b16 %v216
    %v256 = vunpack.c.l.b16 %v217
    %v257 = vunpack.c.l.b16 %v218
    %v258 = vunpack.c.l.b16 %v219
    %v259 = vunpack.c.l.b16 %v220
    %v260 = vunpack.c.l.b16 %v221
    %v261 = vunpack.c.l.b16 %v222
    %v262 = vunpack.c.l.b16 %v223
    %v263 = vunpack.c.l.b16 %v224
    %v264 = vunpack.c.l.b16 %v225
    %v265 = vunpack.c.l.b16 %v226
    %v266 = vpack.c.b16 %v251, %v250
    %v267 = vpack.c.b16 %v253, %v252
    %v268 = vpack.c.b16 %v255, %v254
    %v269 = vpack.c.b16 %v257, %v256
    %v270 = vpack.c.b16 %v259, %v258
    %v271 = vpack.c.b16 %v261, %v260
    %v272 = vpack.c.b16 %v263, %v262
    %v273 = vpack.c.b16 %v265, %v264
    %282 = vmatprep.subr.bf16.mxu0 0
    %283 = vmatpush1.bf16.msra.mxu0 %v273
    %284 = vmatprep.subr.bf16.mxu0 0
    %285 = vmatpush1.bf16.msra.mxu0 %v272
    %286 = vmatprep.subr.bf16.mxu0 0
    %287 = vmatpush1.bf16.msra.mxu0 %v271
    %288 = vmatprep.subr.bf16.mxu0 0
    %289 = vmatpush1.bf16.msra.mxu0 %v270
    %290 = vmatprep.subr.bf16.mxu0 0
    %291 = vmatpush1.bf16.msra.mxu0 %v269
    %292 = vmatprep.subr.bf16.mxu0 0
    %293 = vmatpush1.bf16.msra.mxu0 %v268
    %294 = vmatprep.subr.bf16.mxu0 0
    %295 = vmatpush1.bf16.msra.mxu0 %v267
    %296 = vmatprep.subr.bf16.mxu0 0
    %297 = vmatpush1.bf16.msra.mxu0 %v266
    %298 = vmatprep.subr.bf16.mxu0 0
    %299 = vmatpush2.bf16.msra.mxu0 0
    %300 = vmatprep.subr.bf16.mxu0 0
    %301 = vmatpush2.bf16.msra.mxu0 0
    %302 = vmatprep.subr.bf16.mxu0 0
    %303 = vmatpush2.bf16.msra.mxu0 0
    %304 = vmatprep.subr.bf16.mxu0 0
    %305 = vmatpush2.bf16.msra.mxu0 0
    %306 = vmatprep.subr.bf16.mxu0 0
    %307 = vmatpush2.bf16.msra.mxu0 0
    %308 = vmatprep.subr.bf16.mxu0 0
    %309 = vmatpush2.bf16.msra.mxu0 0
    %310 = vmatprep.subr.bf16.mxu0 0
    %311 = vmatpush2.bf16.msra.mxu0 0
    %312 = vmatprep.subr.bf16.mxu0 0
    %313 = vmatpush2.bf16.msra.mxu0 0
    %314 = vmatprep.mubr.bf16.mxu0 0
    %315 = vmatmul.mubr.bf16.gmra.mxu0 %v210
    %v316 = vpop.f32.mrf.mxu0
    %v317 = vadd.f32 %v232, %v316
    %v318 = vpop.f32.mrf.mxu0
    %v319 = vpop.f32.mrf.mxu0
    %v320 = vpop.f32.mrf.mxu0
    %321 = vdwg.mxu0
    %vm322 = vcmask 130048
    %323 = vst.msk [vmem:[#allocation2] sm:$0xff] %vm322, %v317
    // Predicated region
    $region30: #{mlp_forward.1} parent=1 // pred_check
      _
    $region31: #{mlp_forward.1} parent=1 // pred_check_branch
      %325 = sbr.rel (0) target = $region33
    $region32: #{mlp_forward.1} parent=1 // pred_region
      %s327 = ssub.s32 128, 128
      %328 = vsyncadd [#allocation3], %s327
      %s330 = sshll.u32 [#allocation2], 4
      %s331 = int_to_ptr.vmem [resolvable:$true] %s330
      %333 = dma.vmem_to_hbm [thread:$0]  %s331, 128, %s7, [#allocation3]
    $region33: #{mlp_forward.1} parent=1 // pred_fallthru
      _
    // Predicated region
    $region34: #{mlp_forward.1} parent=1 // pred_check
      _
    $region35: #{mlp_forward.1} parent=1 // pred_check_branch
      %335 = sbr.rel (0) target = $region37
    $region36: #{mlp_forward.1} parent=1 // pred_region
      %336 = dma.done [#allocation3], 128
    $region37: #{mlp_forward.1} parent=1 // pred_fallthru
      _
    %337 = vsyncpa [#allocation3], 1

</llo_original>
